<compile_context>
chip_gen: v7x
topology: tpu7x:2x2x1
jax: 0.10.0
libtpu: 0.0.40
codegen_flags: <defaults>
</compile_context>

<pallas_src>
import functools

import jax
import jax.numpy as jnp
from jax.experimental import pallas as pl
from jax.experimental.pallas import tpu as pltpu


D_IN, D_H1, D_H2, D_OUT = 7, 10, 10, 6


def _round_up(n, m):
    return ((n + m - 1) // m) * m


def _mlp_kernel(x_ref, w1_ref, b1_ref, w2_ref, b2_ref, w3_ref, b3_ref, o_ref):
    # x_ref: (7, TILE_B)  -- batch on the lane axis.
    x = x_ref[...]

    # fc1 + relu : (10, 7) @ (7, TB) -> (10, TB)
    h1 = jnp.dot(w1_ref[...], x, preferred_element_type=jnp.float32)
    h1 = jnp.maximum(h1 + b1_ref[...], 0.0)

    # fc2 + relu : (10, 10) @ (10, TB) -> (10, TB)
    h2 = jnp.dot(w2_ref[...], h1, preferred_element_type=jnp.float32)
    h2 = jnp.maximum(h2 + b2_ref[...], 0.0)

    # fc3 + sigmoid : (6, 10) @ (10, TB) -> (6, TB)
    h3 = jnp.dot(w3_ref[...], h2, preferred_element_type=jnp.float32)
    h3 = h3 + b3_ref[...]
    o_ref[...] = jax.nn.sigmoid(h3).astype(o_ref.dtype)


@functools.partial(jax.jit, static_argnames=("tile_b",))
def net_forward(x, params, *, tile_b=1024):
    """x: (B, 7) float32.  params: w1 (10,7), b1 (10,1), w2 (10,10), b2 (10,1),
    w3 (6,10), b3 (6,1) -- i.e. PyTorch (out_features, in_features) layout."""
    assert tile_b % 128 == 0, "tile_b must be a multiple of 128 (lane width)"
    B = x.shape[0]
    w1, b1 = params["w1"], params["b1"]
    w2, b2 = params["w2"], params["b2"]
    w3, b3 = params["w3"], params["b3"]

    # Feature-major: batch on lanes.  Pad batch to a lane-aligned tile multiple.
    tb = min(tile_b, _round_up(B, 128))
    b_pad = _round_up(B, tb)
    x_t = x.T  # (7, B)
    if b_pad != B:
        x_t = jnp.pad(x_t, ((0, 0), (0, b_pad - B)))

    grid = (b_pad // tb,)

    def const_spec(a):
        # Full-array block, resident across all grid steps.
        return pl.BlockSpec(a.shape, lambda i: (0,) * a.ndim)

    flops = 2 * b_pad * (D_IN * D_H1 + D_H1 * D_H2 + D_H2 * D_OUT)
    bytes_accessed = 4 * b_pad * (D_IN + D_OUT) + 4 * (
        D_IN * D_H1 + D_H1 * D_H2 + D_H2 * D_OUT + D_H1 + D_H2 + D_OUT)

    out_t = pl.pallas_call(
        _mlp_kernel,
        out_shape=jax.ShapeDtypeStruct((D_OUT, b_pad), jnp.float32),
        grid_spec=pltpu.PrefetchScalarGridSpec(
            num_scalar_prefetch=0,
            grid=grid,
            in_specs=[
                pl.BlockSpec((D_IN, tb), lambda i: (0, i)),   # x tile
                const_spec(w1), const_spec(b1),
                const_spec(w2), const_spec(b2),
                const_spec(w3), const_spec(b3),
            ],
            out_specs=pl.BlockSpec((D_OUT, tb), lambda i: (0, i)),
        ),
        compiler_params=pltpu.CompilerParams(
            dimension_semantics=("parallel",),        # megacore on v7x
            vmem_limit_bytes=64 * 1024 * 1024,
        ),
        cost_estimate=pl.CostEstimate(
            flops=flops,
            transcendentals=D_OUT * b_pad,            # sigmoid exp per output
            bytes_accessed=bytes_accessed,
        ),
    )(x_t, w1, b1, w2, b2, w3, b3)

    # Drop batch padding and return (B, 6) like the PyTorch module.
    return out_t[:, :B].T


def init_params(key):
    """PyTorch nn.Linear default init: U[-1/sqrt(fan_in), 1/sqrt(fan_in)].
    Weights stored (out_features, in_features); biases (out_features, 1)."""
    dims = [(D_IN, D_H1), (D_H1, D_H2), (D_H2, D_OUT)]
    params = {}
    for i, (fan_in, fan_out) in enumerate(dims, start=1):
        key, kw, kb = jax.random.split(key, 3)
        bound = 1.0 / (fan_in ** 0.5)
        params[f"w{i}"] = jax.random.uniform(
            kw, (fan_out, fan_in), jnp.float32, minval=-bound, maxval=bound)
        params[f"b{i}"] = jax.random.uniform(
            kb, (fan_out, 1), jnp.float32, minval=-bound, maxval=bound)
    return params


def net_forward_ref(x, params):
    """Pure-JAX reference (batch-major, PyTorch semantics)."""
    h = jnp.maximum(x @ params["w1"].T + params["b1"].T, 0.0)
    h = jnp.maximum(h @ params["w2"].T + params["b2"].T, 0.0)
    return jax.nn.sigmoid(h @ params["w3"].T + params["b3"].T)


if __name__ == "__main__":
    key = jax.random.PRNGKey(0)
    key_p, key_x = jax.random.split(key)

    params = init_params(key_p)
    x = jax.random.normal(key_x, (8, 7), dtype=jnp.float32)  # batch=8, features=7

    out = net_forward(x, params)
    out = jax.block_until_ready(out)

    ref = net_forward_ref(x, params)
    assert out.shape == (8, 6)
    assert jnp.allclose(out, ref, atol=1e-5, rtol=1e-5), "mismatch vs reference"

    # A second, non-tile-aligned batch to exercise the grid + padding path.
    x2 = jax.random.normal(jax.random.PRNGKey(1), (300, 7), dtype=jnp.float32)
    out2 = jax.block_until_ready(net_forward(x2, params, tile_b=128))
    ref2 = net_forward_ref(x2, params)
    assert out2.shape == (300, 6)
    assert jnp.allclose(out2, ref2, atol=1e-5, rtol=1e-5), "mismatch vs reference (tiled)"

    print("KERNEL_OK")
</pallas_src>

<mosaic_0001>
module attributes {stable_mosaic.version = 11 : i64} {
  func.func @_mlp_kernel(%arg0: i32, %arg1: memref<7x128xf32, #tpu.memory_space<vmem>>, %arg2: memref<10x7xf32, #tpu.memory_space<vmem>>, %arg3: memref<10x1xf32, #tpu.memory_space<vmem>>, %arg4: memref<10x10xf32, #tpu.memory_space<vmem>>, %arg5: memref<10x1xf32, #tpu.memory_space<vmem>>, %arg6: memref<6x10xf32, #tpu.memory_space<vmem>>, %arg7: memref<6x1xf32, #tpu.memory_space<vmem>>, %arg8: memref<6x128xf32, #tpu.memory_space<vmem>>) attributes {dimension_semantics = [#tpu.dimension_semantics<parallel>], iteration_bounds = array<i64: 1>, scalar_prefetch = 0 : i64, scratch_operands = 0 : i64, tpu.core_type = #tpu.core_type<tc>, window_params = [{transform_indices = @transform_0, window_bounds = array<i64: 7, 128>}, {pipeline_mode = #tpu.pipeline_mode<synchronous>, transform_indices = @transform_1, window_bounds = array<i64: 10, 7>}, {pipeline_mode = #tpu.pipeline_mode<synchronous>, transform_indices = @transform_2, window_bounds = array<i64: 10, 1>}, {pipeline_mode = #tpu.pipeline_mode<synchronous>, transform_indices = @transform_3, window_bounds = array<i64: 10, 10>}, {pipeline_mode = #tpu.pipeline_mode<synchronous>, transform_indices = @transform_4, window_bounds = array<i64: 10, 1>}, {pipeline_mode = #tpu.pipeline_mode<synchronous>, transform_indices = @transform_5, window_bounds = array<i64: 6, 10>}, {pipeline_mode = #tpu.pipeline_mode<synchronous>, transform_indices = @transform_6, window_bounds = array<i64: 6, 1>}, {transform_indices = @transform_7, window_bounds = array<i64: 6, 128>}]} {
    %c0 = arith.constant 0 : index
    %c0_0 = arith.constant 0 : index
    %0 = vector.load %arg1[%c0, %c0_0] : memref<7x128xf32, #tpu.memory_space<vmem>>, vector<7x128xf32>
    %c0_1 = arith.constant 0 : index
    %c0_2 = arith.constant 0 : index
    %1 = vector.load %arg2[%c0_1, %c0_2] : memref<10x7xf32, #tpu.memory_space<vmem>>, vector<10x7xf32>
    %cst = arith.constant dense<0.000000e+00> : vector<10x128xf32>
    %2 = tpu.matmul %1, %0, %cst {dimension_numbers = #tpu.dot_dimension_numbers<[1], [0], [0], [1], [0, 0, 1, 1], [], []>} : vector<10x7xf32>, vector<7x128xf32>, vector<10x128xf32> -> vector<10x128xf32>
    %c0_3 = arith.constant 0 : index
    %c0_4 = arith.constant 0 : index
    %3 = vector.load %arg3[%c0_3, %c0_4] : memref<10x1xf32, #tpu.memory_space<vmem>>, vector<10x1xf32>
    %4 = vector.broadcast %3 : vector<10x1xf32> to vector<10x128xf32>
    %5 = arith.addf %2, %4 : vector<10x128xf32>
    %cst_5 = arith.constant 0.000000e+00 : f32
    %6 = vector.broadcast %cst_5 : f32 to vector<10x128xf32>
    %7 = arith.maximumf %5, %6 : vector<10x128xf32>
    %c0_6 = arith.constant 0 : index
    %c0_7 = arith.constant 0 : index
    %8 = vector.load %arg4[%c0_6, %c0_7] : memref<10x10xf32, #tpu.memory_space<vmem>>, vector<10x10xf32>
    %cst_8 = arith.constant dense<0.000000e+00> : vector<10x128xf32>
    %9 = tpu.matmul %8, %7, %cst_8 {dimension_numbers = #tpu.dot_dimension_numbers<[1], [0], [0], [1], [0, 0, 1, 1], [], []>} : vector<10x10xf32>, vector<10x128xf32>, vector<10x128xf32> -> vector<10x128xf32>
    %c0_9 = arith.constant 0 : index
    %c0_10 = arith.constant 0 : index
    %10 = vector.load %arg5[%c0_9, %c0_10] : memref<10x1xf32, #tpu.memory_space<vmem>>, vector<10x1xf32>
    %11 = vector.broadcast %10 : vector<10x1xf32> to vector<10x128xf32>
    %12 = arith.addf %9, %11 : vector<10x128xf32>
    %cst_11 = arith.constant 0.000000e+00 : f32
    %13 = vector.broadcast %cst_11 : f32 to vector<10x128xf32>
    %14 = arith.maximumf %12, %13 : vector<10x128xf32>
    %c0_12 = arith.constant 0 : index
    %c0_13 = arith.constant 0 : index
    %15 = vector.load %arg6[%c0_12, %c0_13] : memref<6x10xf32, #tpu.memory_space<vmem>>, vector<6x10xf32>
    %cst_14 = arith.constant dense<0.000000e+00> : vector<6x128xf32>
    %16 = tpu.matmul %15, %14, %cst_14 {dimension_numbers = #tpu.dot_dimension_numbers<[1], [0], [0], [1], [0, 0, 1, 1], [], []>} : vector<6x10xf32>, vector<10x128xf32>, vector<6x128xf32> -> vector<6x128xf32>
    %c0_15 = arith.constant 0 : index
    %c0_16 = arith.constant 0 : index
    %17 = vector.load %arg7[%c0_15, %c0_16] : memref<6x1xf32, #tpu.memory_space<vmem>>, vector<6x1xf32>
    %18 = vector.broadcast %17 : vector<6x1xf32> to vector<6x128xf32>
    %19 = arith.addf %16, %18 : vector<6x128xf32>
    %20 = arith.negf %19 : vector<6x128xf32>
    %21 = math.exp %20 : vector<6x128xf32>
    %cst_17 = arith.constant 1.000000e+00 : f32
    %22 = vector.broadcast %cst_17 : f32 to vector<6x128xf32>
    %23 = arith.addf %22, %21 : vector<6x128xf32>
    %24 = arith.divf %22, %23 : vector<6x128xf32>
    %c0_18 = arith.constant 0 : index
    %c0_19 = arith.constant 0 : index
    %25 = vector.load %arg8[%c0_18, %c0_19] : memref<6x128xf32, #tpu.memory_space<vmem>>, vector<6x128xf32>
    tpu.vector_store %arg8[%c0_18, %c0_19], %24 {strides = array<i32>} : memref<6x128xf32, #tpu.memory_space<vmem>>, vector<6x128xf32>,
    return
  }
  func.func @transform_0(%arg0: i32) -> (i32, i32) {
    %c0_i32 = arith.constant 0 : i32
    %c0_i32_0 = arith.constant 0 : i32
    return %c0_i32, %arg0 : i32, i32
  }
  func.func @transform_1(%arg0: i32) -> (i32, i32) {
    %c0_i32 = arith.constant 0 : i32
    %c0_i32_0 = arith.constant 0 : i32
    %c0_i32_1 = arith.constant 0 : i32
    return %c0_i32, %c0_i32_0 : i32, i32
  }
  func.func @transform_2(%arg0: i32) -> (i32, i32) {
    %c0_i32 = arith.constant 0 : i32
    %c0_i32_0 = arith.constant 0 : i32
    %c0_i32_1 = arith.constant 0 : i32
    return %c0_i32, %c0_i32_0 : i32, i32
  }
  func.func @transform_3(%arg0: i32) -> (i32, i32) {
    %c0_i32 = arith.constant 0 : i32
    %c0_i32_0 = arith.constant 0 : i32
    %c0_i32_1 = arith.constant 0 : i32
    return %c0_i32, %c0_i32_0 : i32, i32
  }
  func.func @transform_4(%arg0: i32) -> (i32, i32) {
    %c0_i32 = arith.constant 0 : i32
    %c0_i32_0 = arith.constant 0 : i32
    %c0_i32_1 = arith.constant 0 : i32
    return %c0_i32, %c0_i32_0 : i32, i32
  }
  func.func @transform_5(%arg0: i32) -> (i32, i32) {
    %c0_i32 = arith.constant 0 : i32
    %c0_i32_0 = arith.constant 0 : i32
    %c0_i32_1 = arith.constant 0 : i32
    return %c0_i32, %c0_i32_0 : i32, i32
  }
  func.func @transform_6(%arg0: i32) -> (i32, i32) {
    %c0_i32 = arith.constant 0 : i32
    %c0_i32_0 = arith.constant 0 : i32
    %c0_i32_1 = arith.constant 0 : i32
    return %c0_i32, %c0_i32_0 : i32, i32
  }
  func.func @transform_7(%arg0: i32) -> (i32, i32) {
    %c0_i32 = arith.constant 0 : i32
    %c0_i32_0 = arith.constant 0 : i32
    return %c0_i32, %arg0 : i32, i32
  }
}

</mosaic_0001>

<llo_original>
// kernel: net_forward.1
$region0: #{net_forward.1}
  #allocation0 [shape = 'u32[]', space=smem, size = 0x4, offset = 0x4, fixed_abs, tag = 'smem constant byte address 0x4 - core index']
  #allocation1 [shape = 'u32[144,128]{1,0:T(1,128)}', space=vmem, size = 0x12000, scoped, tag = 'internal scratch']
  %s0 = inlined_call_operand.hbm [shape: f32[7,128], index: 0, kind: input, shape index: {}]
  %s1 = inlined_call_operand.hbm [shape: f32[10,7], index: 1, kind: input, shape index: {}]
  %s2 = inlined_call_operand.hbm [shape: f32[10,1], index: 2, kind: input, shape index: {}]
  %s3 = inlined_call_operand.hbm [shape: f32[10,10], index: 3, kind: input, shape index: {}]
  %s4 = inlined_call_operand.hbm [shape: f32[10,1], index: 4, kind: input, shape index: {}]
  %s5 = inlined_call_operand.hbm [shape: f32[6,10], index: 5, kind: input, shape index: {}]
  %s6 = inlined_call_operand.hbm [shape: f32[6,1], index: 6, kind: input, shape index: {}]
  %s7 = inlined_call_operand.hbm [shape: f32[6,128], index: 7, kind: output, shape index: {}]
  %s8 = sld [smem:[#allocation0]]
  $region66: #{net_forward.1} parent=0
    _
  %s10 = ssub.s32 1, %s8
  %s11 = scalar_select 0, %s10, %s8
  $region1: #{net_forward.1} parent=0
    #allocation2 [shape = 'u8[4096]{0}', space=vmem, size = 0x1000, scoped, tag = 'input window, operand 0, single buffered']
    #allocation3 [shape = 's32[1]{0}', space=sflag, size = 0x4, scoped, tag = 'scoped memory for net_forward.1']
    #allocation4 [shape = 's32[1]{0}', space=sflag, size = 0x4, scoped, tag = 'scoped memory for net_forward.1']
    #allocation5 [shape = 'u8[8192]{0}', space=vmem, size = 0x2000, scoped, tag = 'input window, operand 1, single buffered']
    #allocation6 [shape = 's32[1]{0}', space=sflag, size = 0x4, scoped, tag = 'scoped memory for net_forward.1']
    #allocation7 [shape = 'u8[8192]{0}', space=vmem, size = 0x2000, scoped, tag = 'input window, operand 2, single buffered']
    #allocation8 [shape = 'u8[8192]{0}', space=vmem, size = 0x2000, scoped, tag = 'input window, operand 3, single buffered']
    #allocation9 [shape = 's32[1]{0}', space=sflag, size = 0x4, scoped, tag = 'scoped memory for net_forward.1']
    #allocation10 [shape = 'u8[8192]{0}', space=vmem, size = 0x2000, scoped, tag = 'input window, operand 4, single buffered']
    #allocation11 [shape = 'u8[4096]{0}', space=vmem, size = 0x1000, scoped, tag = 'input window, operand 5, single buffered']
    #allocation12 [shape = 's32[1]{0}', space=sflag, size = 0x4, scoped, tag = 'scoped memory for net_forward.1']
    #allocation13 [shape = 'u8[4096]{0}', space=vmem, size = 0x1000, scoped, tag = 'input window, operand 6, single buffered']
    #allocation14 [shape = 'u8[4096]{0}', space=vmem, size = 0x1000, scoped, tag = 'output window, operand 0, single buffered']
    %12 = vsyncpa [#allocation3], 0
    %13 = vsyncpa [#allocation6], 0
    %14 = vsyncpa [#allocation9], 0
    %15 = vsyncpa [#allocation12], 0
    %16 = vsyncpa [#allocation4], 0
    // Predicated region
    $region2: #{net_forward.1} parent=1 // pred_check
      _
    $region3: #{net_forward.1} parent=1 // pred_check_branch
      %18 = sbr.rel (0) target = $region5
    $region4: #{net_forward.1} parent=1 // pred_region
      %s20 = ssub.s32 128, 128
      %21 = vsyncadd [#allocation3], %s20
      %s23 = sshll.u32 [#allocation2], 4
      %s24 = int_to_ptr.vmem [resolvable:$true] %s23
      %26 = dma.hbm_to_vmem [thread:$0]  %s0, 128, %s24, [#allocation3]
    $region5: #{net_forward.1} parent=1 // pred_fallthru
      _
    // Predicated region
    $region6: #{net_forward.1} parent=1 // pred_check
      _
    $region7: #{net_forward.1} parent=1 // pred_check_branch
      %28 = sbr.rel (0) target = $region9
    $region8: #{net_forward.1} parent=1 // pred_region
      %s30 = ssub.s32 256, 256
      %31 = vsyncadd [#allocation6], %s30
      %s32 = sshll.u32 [#allocation5], 4
      %s33 = int_to_ptr.vmem [resolvable:$true] %s32
      %38 = dma.hbm_to_vmem [thread:$0]  %s1, 256, %s33, [#allocation6], 128, 128, 8
    $region9: #{net_forward.1} parent=1 // pred_fallthru
      _
    // Predicated region
    $region10: #{net_forward.1} parent=1 // pred_check
      _
    $region11: #{net_forward.1} parent=1 // pred_check_branch
      %40 = sbr.rel (0) target = $region13
    $region12: #{net_forward.1} parent=1 // pred_region
      %s42 = ssub.s32 256, 256
      %43 = vsyncadd [#allocation6], %s42
      %s44 = sshll.u32 [#allocation7], 4
      %s45 = int_to_ptr.vmem [resolvable:$true] %s44
      %50 = dma.hbm_to_vmem [thread:$0]  %s2, 256, %s45, [#allocation6], 128, 128, 8
    $region13: #{net_forward.1} parent=1 // pred_fallthru
      _
    // Predicated region
    $region14: #{net_forward.1} parent=1 // pred_check
      _
    $region15: #{net_forward.1} parent=1 // pred_check_branch
      %52 = sbr.rel (0) target = $region17
    $region16: #{net_forward.1} parent=1 // pred_region
      %s54 = ssub.s32 256, 256
      %55 = vsyncadd [#allocation9], %s54
      %s56 = sshll.u32 [#allocation8], 4
      %s57 = int_to_ptr.vmem [resolvable:$true] %s56
      %62 = dma.hbm_to_vmem [thread:$0]  %s3, 256, %s57, [#allocation9], 128, 128, 8
    $region17: #{net_forward.1} parent=1 // pred_fallthru
      _
    // Predicated region
    $region18: #{net_forward.1} parent=1 // pred_check
      _
    $region19: #{net_forward.1} parent=1 // pred_check_branch
      %64 = sbr.rel (0) target = $region21
    $region20: #{net_forward.1} parent=1 // pred_region
      %s66 = ssub.s32 256, 256
      %67 = vsyncadd [#allocation9], %s66
      %s68 = sshll.u32 [#allocation10], 4
      %s69 = int_to_ptr.vmem [resolvable:$true] %s68
      %74 = dma.hbm_to_vmem [thread:$0]  %s4, 256, %s69, [#allocation9], 128, 128, 8
    $region21: #{net_forward.1} parent=1 // pred_fallthru
      _
    // Predicated region
    $region22: #{net_forward.1} parent=1 // pred_check
      _
    $region23: #{net_forward.1} parent=1 // pred_check_branch
      %76 = sbr.rel (0) target = $region25
    $region24: #{net_forward.1} parent=1 // pred_region
      %s78 = ssub.s32 128, 128
      %79 = vsyncadd [#allocation12], %s78
      %s81 = sshll.u32 [#allocation11], 4
      %s82 = int_to_ptr.vmem [resolvable:$true] %s81
      %84 = dma.hbm_to_vmem [thread:$0]  %s5, 128, %s82, [#allocation12]
    $region25: #{net_forward.1} parent=1 // pred_fallthru
      _
    // Predicated region
    $region26: #{net_forward.1} parent=1 // pred_check
      _
    $region27: #{net_forward.1} parent=1 // pred_check_branch
      %86 = sbr.rel (0) target = $region29
    $region28: #{net_forward.1} parent=1 // pred_region
      %s88 = ssub.s32 128, 128
      %89 = vsyncadd [#allocation12], %s88
      %s91 = sshll.u32 [#allocation13], 4
      %s92 = int_to_ptr.vmem [resolvable:$true] %s91
      %94 = dma.hbm_to_vmem [thread:$0]  %s6, 128, %s92, [#allocation12]
    $region29: #{net_forward.1} parent=1 // pred_fallthru
      _
    // Predicated region
    $region30: #{net_forward.1} parent=1 // pred_check
      _
    $region31: #{net_forward.1} parent=1 // pred_check_branch
      %96 = sbr.rel (0) target = $region33
    $region32: #{net_forward.1} parent=1 // pred_region
      %97 = dma.done [#allocation3], 128
    $region33: #{net_forward.1} parent=1 // pred_fallthru
      _
    // Predicated region
    $region34: #{net_forward.1} parent=1 // pred_check
      _
    $region35: #{net_forward.1} parent=1 // pred_check_branch
      %99 = sbr.rel (0) target = $region37
    $region36: #{net_forward.1} parent=1 // pred_region
      %100 = dma.done [#allocation6], 256
    $region37: #{net_forward.1} parent=1 // pred_fallthru
      _
    // Predicated region
    $region38: #{net_forward.1} parent=1 // pred_check
      _
    $region39: #{net_forward.1} parent=1 // pred_check_branch
      %102 = sbr.rel (0) target = $region41
    $region40: #{net_forward.1} parent=1 // pred_region
      %103 = dma.done [#allocation6], 256
    $region41: #{net_forward.1} parent=1 // pred_fallthru
      _
    // Predicated region
    $region42: #{net_forward.1} parent=1 // pred_check
      _
    $region43: #{net_forward.1} parent=1 // pred_check_branch
      %105 = sbr.rel (0) target = $region45
    $region44: #{net_forward.1} parent=1 // pred_region
      %106 = dma.done [#allocation9], 256
    $region45: #{net_forward.1} parent=1 // pred_fallthru
      _
    // Predicated region
    $region46: #{net_forward.1} parent=1 // pred_check
      _
    $region47: #{net_forward.1} parent=1 // pred_check_branch
      %108 = sbr.rel (0) target = $region49
    $region48: #{net_forward.1} parent=1 // pred_region
      %109 = dma.done [#allocation9], 256
    $region49: #{net_forward.1} parent=1 // pred_fallthru
      _
    // Predicated region
    $region50: #{net_forward.1} parent=1 // pred_check
      _
    $region51: #{net_forward.1} parent=1 // pred_check_branch
      %111 = sbr.rel (0) target = $region53
    $region52: #{net_forward.1} parent=1 // pred_region
      %112 = dma.done [#allocation12], 128
    $region53: #{net_forward.1} parent=1 // pred_fallthru
      _
    // Predicated region
    $region54: #{net_forward.1} parent=1 // pred_check
      _
    $region55: #{net_forward.1} parent=1 // pred_check_branch
      %114 = sbr.rel (0) target = $region57
    $region56: #{net_forward.1} parent=1 // pred_region
      %115 = dma.done [#allocation12], 128
    $region57: #{net_forward.1} parent=1 // pred_fallthru
      _
    %v116 = vld [vmem:[#allocation2] sm:$0x7f]
    %v117 = vld [vmem:[#allocation5] sm:$0xff]
    %v118 = vld [vmem:[#allocation5 + $0x8] sm:$0x3]
    %v119 = vld [vmem:[#allocation7] sm:$0xff]
    %v120 = vld [vmem:[#allocation7 + $0x8] sm:$0x3]
    %122 = vset.pattern.permute.xlu0 0
    %123 = vperm.xlu0 %122, %v119
    %v124 = vpop.permute.xlu0 %123
    %127 = vset.pattern.permute.xlu0 0
    %128 = vperm.xlu0 %127, %v120
    %v129 = vpop.permute.xlu0 %128
    %vm131 = vcmask 56320
    %v133 = vsel %vm131, %v117, 0
    %v136 = vsel %vm131, %v118, 0
    %vm138 = vcmask 1046528
    %v140 = vsel %vm138, %v116, 0
    %142 = vmatprep.subr.mxu0 0.0
    %143 = vmatpush1.msra.mxu0 %v140
    %144 = vmatprep.subr.mxu0 0.0
    %145 = vmatpush1.msra.mxu0 0.0
    %146 = vmatprep.subr.mxu0 0.0
    %147 = vmatpush1.msra.mxu0 0.0
    %148 = vmatprep.subr.mxu0 0.0
    %149 = vmatpush1.msra.mxu0 0.0
    %150 = vmatprep.subr.mxu0 0.0
    %151 = vmatpush1.msra.mxu0 0.0
    %152 = vmatprep.subr.mxu0 0.0
    %153 = vmatpush1.msra.mxu0 0.0
    %154 = vmatprep.subr.mxu0 0.0
    %155 = vmatpush1.msra.mxu0 0.0
    %156 = vmatprep.subr.mxu0 0.0
    %157 = vmatpush1.msra.mxu0 0.0
    %158 = vmatprep.subr.mxu0 0.0
    %159 = vmatpush1.msra.mxu0 0.0
    %160 = vmatprep.subr.mxu0 0.0
    %161 = vmatpush1.msra.mxu0 0.0
    %162 = vmatprep.subr.mxu0 0.0
    %163 = vmatpush1.msra.mxu0 0.0
    %164 = vmatprep.subr.mxu0 0.0
    %165 = vmatpush1.msra.mxu0 0.0
    %166 = vmatprep.subr.mxu0 0.0
    %167 = vmatpush1.msra.mxu0 0.0
    %168 = vmatprep.subr.mxu0 0.0
    %169 = vmatpush1.msra.mxu0 0.0
    %170 = vmatprep.subr.mxu0 0.0
    %171 = vmatpush1.msra.mxu0 0.0
    %172 = vmatprep.subr.mxu0 0.0
    %173 = vmatpush1.msra.mxu0 0.0
    %174 = vmatprep.subr.mxu0 0.0
    %175 = vmatpush1.msra.mxu0 0.0
    %176 = vmatprep.subr.mxu0 0.0
    %177 = vmatpush1.msra.mxu0 0.0
    %178 = vmatprep.subr.mxu0 0.0
    %179 = vmatpush1.msra.mxu0 0.0
    %180 = vmatprep.subr.mxu0 0.0
    %181 = vmatpush1.msra.mxu0 0.0
    %182 = vmatprep.subr.mxu0 0.0
    %183 = vmatpush1.msra.mxu0 0.0
    %184 = vmatprep.subr.mxu0 0.0
    %185 = vmatpush1.msra.mxu0 0.0
    %186 = vmatprep.subr.mxu0 0.0
    %187 = vmatpush1.msra.mxu0 0.0
    %188 = vmatprep.subr.mxu0 0.0
    %189 = vmatpush1.msra.mxu0 0.0
    %190 = vmatprep.subr.mxu0 0.0
    %191 = vmatpush1.msra.mxu0 0.0
    %192 = vmatprep.subr.mxu0 0.0
    %193 = vmatpush1.msra.mxu0 0.0
    %194 = vmatprep.subr.mxu0 0.0
    %195 = vmatpush1.msra.mxu0 0.0
    %196 = vmatprep.subr.mxu0 0.0
    %197 = vmatpush1.msra.mxu0 0.0
    %198 = vmatprep.subr.mxu0 0.0
    %199 = vmatpush1.msra.mxu0 0.0
    %200 = vmatprep.subr.mxu0 0.0
    %201 = vmatpush1.msra.mxu0 0.0
    %202 = vmatprep.subr.mxu0 0.0
    %203 = vmatpush1.msra.mxu0 0.0
    %204 = vmatprep.subr.mxu0 0.0
    %205 = vmatpush1.msra.mxu0 0.0
    %206 = vmatprep.mubr.f32.mxu0 0.0
    %207 = vmatmul.mubr.f32.gmra.mrb[0].mxu0 %v133
    %v208 = vpop.f32.mrb[0].mxu0
    %v209 = vadd.f32 %v124, %v208
    %v210 = vpop.f32.mrb[0].mxu0
    %211 = vmatprep.mubr.f32.mxu0 0.0
    %212 = vmatmul.mubr.f32.gmra.mrb[0].mxu0 %v136
    %v213 = vpop.f32.mrb[0].mxu0
    %v214 = vadd.f32 %v129, %v213
    %v215 = vpop.f32.mrb[0].mxu0
    %216 = vdwg.mxu0
    %v217 = vmax.f32 %v209, 0.0
    %v218 = vmax.f32 %v214, 0.0
    %v219 = vld [vmem:[#allocation8] sm:$0xff]
    %v220 = vld [vmem:[#allocation8 + $0x8] sm:$0x3]
    %v221 = vld [vmem:[#allocation10] sm:$0xff]
    %v222 = vld [vmem:[#allocation10 + $0x8] sm:$0x3]
    %224 = vset.pattern.permute.xlu0 0
    %225 = vperm.xlu0 %224, %v221
    %v226 = vpop.permute.xlu0 %225
    %229 = vset.pattern.permute.xlu0 0
    %230 = vperm.xlu0 %229, %v222
    %v231 = vpop.permute.xlu0 %230
    %vm233 = vcmask 80896
    %v235 = vsel %vm233, %v219, 0
    %v238 = vsel %vm233, %v220, 0
    %vm240 = vcmask 1041408
    %v242 = vsel %vm240, %v218, 0
    %244 = vmatprep.subr.mxu0 0.0
    %245 = vmatpush1.msra.mxu0 %v217
    %246 = vmatprep.subr.mxu0 0.0
    %247 = vmatpush1.msra.mxu0 %v242
    %248 = vmatprep.subr.mxu0 0.0
    %249 = vmatpush1.msra.mxu0 0.0
    %250 = vmatprep.subr.mxu0 0.0
    %251 = vmatpush1.msra.mxu0 0.0
    %252 = vmatprep.subr.mxu0 0.0
    %253 = vmatpush1.msra.mxu0 0.0
    %254 = vmatprep.subr.mxu0 0.0
    %255 = vmatpush1.msra.mxu0 0.0
    %256 = vmatprep.subr.mxu0 0.0
    %257 = vmatpush1.msra.mxu0 0.0
    %258 = vmatprep.subr.mxu0 0.0
    %259 = vmatpush1.msra.mxu0 0.0
    %260 = vmatprep.subr.mxu0 0.0
    %261 = vmatpush1.msra.mxu0 0.0
    %262 = vmatprep.subr.mxu0 0.0
    %263 = vmatpush1.msra.mxu0 0.0
    %264 = vmatprep.subr.mxu0 0.0
    %265 = vmatpush1.msra.mxu0 0.0
    %266 = vmatprep.subr.mxu0 0.0
    %267 = vmatpush1.msra.mxu0 0.0
    %268 = vmatprep.subr.mxu0 0.0
    %269 = vmatpush1.msra.mxu0 0.0
    %270 = vmatprep.subr.mxu0 0.0
    %271 = vmatpush1.msra.mxu0 0.0
    %272 = vmatprep.subr.mxu0 0.0
    %273 = vmatpush1.msra.mxu0 0.0
    %274 = vmatprep.subr.mxu0 0.0
    %275 = vmatpush1.msra.mxu0 0.0
    %276 = vmatprep.subr.mxu0 0.0
    %277 = vmatpush1.msra.mxu0 0.0
    %278 = vmatprep.subr.mxu0 0.0
    %279 = vmatpush1.msra.mxu0 0.0
    %280 = vmatprep.subr.mxu0 0.0
    %281 = vmatpush1.msra.mxu0 0.0
    %282 = vmatprep.subr.mxu0 0.0
    %283 = vmatpush1.msra.mxu0 0.0
    %284 = vmatprep.subr.mxu0 0.0
    %285 = vmatpush1.msra.mxu0 0.0
    %286 = vmatprep.subr.mxu0 0.0
    %287 = vmatpush1.msra.mxu0 0.0
    %288 = vmatprep.subr.mxu0 0.0
    %289 = vmatpush1.msra.mxu0 0.0
    %290 = vmatprep.subr.mxu0 0.0
    %291 = vmatpush1.msra.mxu0 0.0
    %292 = vmatprep.subr.mxu0 0.0
    %293 = vmatpush1.msra.mxu0 0.0
    %294 = vmatprep.subr.mxu0 0.0
    %295 = vmatpush1.msra.mxu0 0.0
    %296 = vmatprep.subr.mxu0 0.0
    %297 = vmatpush1.msra.mxu0 0.0
    %298 = vmatprep.subr.mxu0 0.0
    %299 = vmatpush1.msra.mxu0 0.0
    %300 = vmatprep.subr.mxu0 0.0
    %301 = vmatpush1.msra.mxu0 0.0
    %302 = vmatprep.subr.mxu0 0.0
    %303 = vmatpush1.msra.mxu0 0.0
    %304 = vmatprep.subr.mxu0 0.0
    %305 = vmatpush1.msra.mxu0 0.0
    %306 = vmatprep.subr.mxu0 0.0
    %307 = vmatpush1.msra.mxu0 0.0
    %308 = vmatprep.mubr.f32.mxu0 0.0
    %309 = vmatmul.mubr.f32.gmra.mrb[0].mxu0 %v235
    %v310 = vpop.f32.mrb[0].mxu0
    %v311 = vadd.f32 %v226, %v310
    %v312 = vpop.f32.mrb[0].mxu0
    %313 = vmatprep.mubr.f32.mxu0 0.0
    %314 = vmatmul.mubr.f32.gmra.mrb[0].mxu0 %v238
    %v315 = vpop.f32.mrb[0].mxu0
    %v316 = vadd.f32 %v231, %v315
    %v317 = vpop.f32.mrb[0].mxu0
    %318 = vdwg.mxu0
    %v319 = vmax.f32 %v311, 0.0
    %v320 = vmax.f32 %v316, 0.0
    %v321 = vld [vmem:[#allocation11] sm:$0x3f]
    %v322 = vld [vmem:[#allocation13] sm:$0x3f]
    %324 = vset.pattern.permute.xlu0 0
    %325 = vperm.xlu0 %324, %v322
    %v326 = vpop.permute.xlu0 %325
    %v329 = vsel %vm233, %v321, 0
    %v332 = vsel %vm240, %v320, 0
    %334 = vmatprep.subr.mxu0 0.0
    %335 = vmatpush1.msra.mxu0 %v319
    %336 = vmatprep.subr.mxu0 0.0
    %337 = vmatpush1.msra.mxu0 %v332
    %338 = vmatprep.subr.mxu0 0.0
    %339 = vmatpush1.msra.mxu0 0.0
    %340 = vmatprep.subr.mxu0 0.0
    %341 = vmatpush1.msra.mxu0 0.0
    %342 = vmatprep.subr.mxu0 0.0
    %343 = vmatpush1.msra.mxu0 0.0
    %344 = vmatprep.subr.mxu0 0.0
    %345 = vmatpush1.msra.mxu0 0.0
    %346 = vmatprep.subr.mxu0 0.0
    %347 = vmatpush1.msra.mxu0 0.0
    %348 = vmatprep.subr.mxu0 0.0
    %349 = vmatpush1.msra.mxu0 0.0
    %350 = vmatprep.subr.mxu0 0.0
    %351 = vmatpush1.msra.mxu0 0.0
    %352 = vmatprep.subr.mxu0 0.0
    %353 = vmatpush1.msra.mxu0 0.0
    %354 = vmatprep.subr.mxu0 0.0
    %355 = vmatpush1.msra.mxu0 0.0
    %356 = vmatprep.subr.mxu0 0.0
    %357 = vmatpush1.msra.mxu0 0.0
    %358 = vmatprep.subr.mxu0 0.0
    %359 = vmatpush1.msra.mxu0 0.0
    %360 = vmatprep.subr.mxu0 0.0
    %361 = vmatpush1.msra.mxu0 0.0
    %362 = vmatprep.subr.mxu0 0.0
    %363 = vmatpush1.msra.mxu0 0.0
    %364 = vmatprep.subr.mxu0 0.0
    %365 = vmatpush1.msra.mxu0 0.0
    %366 = vmatprep.subr.mxu0 0.0
    %367 = vmatpush1.msra.mxu0 0.0
    %368 = vmatprep.subr.mxu0 0.0
    %369 = vmatpush1.msra.mxu0 0.0
    %370 = vmatprep.subr.mxu0 0.0
    %371 = vmatpush1.msra.mxu0 0.0
    %372 = vmatprep.subr.mxu0 0.0
    %373 = vmatpush1.msra.mxu0 0.0
    %374 = vmatprep.subr.mxu0 0.0
    %375 = vmatpush1.msra.mxu0 0.0
    %376 = vmatprep.subr.mxu0 0.0
    %377 = vmatpush1.msra.mxu0 0.0
    %378 = vmatprep.subr.mxu0 0.0
    %379 = vmatpush1.msra.mxu0 0.0
    %380 = vmatprep.subr.mxu0 0.0
    %381 = vmatpush1.msra.mxu0 0.0
    %382 = vmatprep.subr.mxu0 0.0
    %383 = vmatpush1.msra.mxu0 0.0
    %384 = vmatprep.subr.mxu0 0.0
    %385 = vmatpush1.msra.mxu0 0.0
    %386 = vmatprep.subr.mxu0 0.0
    %387 = vmatpush1.msra.mxu0 0.0
    %388 = vmatprep.subr.mxu0 0.0
    %389 = vmatpush1.msra.mxu0 0.0
    %390 = vmatprep.subr.mxu0 0.0
    %391 = vmatpush1.msra.mxu0 0.0
    %392 = vmatprep.subr.mxu0 0.0
    %393 = vmatpush1.msra.mxu0 0.0
    %394 = vmatprep.subr.mxu0 0.0
    %395 = vmatpush1.msra.mxu0 0.0
    %396 = vmatprep.subr.mxu0 0.0
    %397 = vmatpush1.msra.mxu0 0.0
    %398 = vmatprep.mubr.f32.mxu0 0.0
    %399 = vmatmul.mubr.f32.gmra.mrb[0].mxu0 %v329
    %v400 = vpop.f32.mrb[0].mxu0
    %v401 = vadd.f32 %v326, %v400
    %v402 = vpop.f32.mrb[0].mxu0
    %403 = vdwg.mxu0
    %v404 = vxor.u32 %v401, 2147483648
    %v405 = vmul.f32 %v404, 1.442695
    %v406 = vpow.pop %v405
    %v407 = vadd.f32 %v406, 1.0
    %v408 = vrcp.pop %v407
    %v409 = vmul.f32 1.0, %v408
    %410 = vst [vmem:[#allocation14] sm:$0x3f] %v409
    // Predicated region
    $region58: #{net_forward.1} parent=1 // pred_check
      _
    $region59: #{net_forward.1} parent=1 // pred_check_branch
      %412 = sbr.rel (0) target = $region61
    $region60: #{net_forward.1} parent=1 // pred_region
      %s414 = ssub.s32 128, 128
      %415 = vsyncadd [#allocation4], %s414
      %s417 = sshll.u32 [#allocation14], 4
      %s418 = int_to_ptr.vmem [resolvable:$true] %s417
      %420 = dma.vmem_to_hbm [thread:$0]  %s418, 128, %s7, [#allocation4]
    $region61: #{net_forward.1} parent=1 // pred_fallthru
      _
    // Predicated region
    $region62: #{net_forward.1} parent=1 // pred_check
      _
    $region63: #{net_forward.1} parent=1 // pred_check_branch
      %422 = sbr.rel (0) target = $region65
    $region64: #{net_forward.1} parent=1 // pred_region
      %423 = dma.done [#allocation4], 128
    $region65: #{net_forward.1} parent=1 // pred_fallthru
      _
    %424 = vsyncpa [#allocation3], 1
    %425 = vsyncpa [#allocation6], 1
    %426 = vsyncpa [#allocation9], 1
    %427 = vsyncpa [#allocation12], 1
    %428 = vsyncpa [#allocation4], 1

</llo_original>
